<compile_context>
chip_gen: v5e
topology: v5e:2x2
jax: 0.10.0
libtpu: 0.0.40
codegen_flags: <defaults>
</compile_context>

<pallas_src>
import functools

import jax
import jax.numpy as jnp
from jax.experimental import pallas as pl
from jax.experimental.pallas import tpu as pltpu

# Deterministic fixed-point parameters (stand-ins for Parameter().wl / .fl)
WL = 16  # word length (bits)
FL = 8   # fractional length (bits)

_LANES = 128


def _sigmoid_quant_kernel(x_ref, o_ref):
    x = x_ref[...].astype(jnp.float32)
    # sigmoid(x) = 0.5 * tanh(0.5 * x) + 0.5  (one EUP transcendental).
    # Fold the 0.5 factors into the fixed-point scale:
    #   q = round(sigmoid(x) * 2^FL) * 2^-FL
    #     = round(tanh(0.5*x) * 2^(FL-1) + 2^(FL-1)) * 2^-FL
    half_scale = jnp.float32(2.0 ** (FL - 1))
    inv_scale = jnp.float32(2.0 ** (-FL))
    # TODO(synk): jnp.round is round-half-to-even; if the FixedTorch quantizer
    # uses floor(x*scale + 0.5) (half-up), ties at half-LSB boundaries differ
    # by exactly one LSB.
    q = jnp.round(jnp.tanh(0.5 * x) * half_scale + half_scale) * inv_scale
    # Sigmoid output in [0,1] is inside the signed (WL,FL) range for FL<=WL-2,
    # so no saturation clip is needed.
    o_ref[...] = q.astype(o_ref.dtype)


def _round_up(v, m):
    return ((v + m - 1) // m) * m


def _device_kind():
    try:
        return jax.devices()[0].device_kind.lower()
    except Exception:
        return ""


def _chip_default_block_rows():
    """Per-generation default tile height (rows of 128 lanes)."""
    kind = _device_kind()
    if "v7" in kind or "v6" in kind:
        # 32 MiB default scoped VMEM: 8192x128 f32 = 4 MiB tile -> 16 MiB total
        # with double-buffered input + output.
        return 8192
    # v5e (16 MiB default scoped VMEM) and older / unknown chips: 2 MiB tile,
    # 8 MiB total, leaving headroom for internal compiler scratch.
    return 4096


def _is_dual_tensorcore():
    return "v7" in _device_kind()


@functools.partial(jax.jit, static_argnames=("block_rows",))
def fixed_sigmoid(x, block_rows=None):
    """Elementwise fixed-point approximate sigmoid. Shape- and dtype-preserving."""
    orig_shape = x.shape
    orig_dtype = x.dtype

    flat = x.reshape(-1)
    n = flat.shape[0]

    if block_rows is None:
        block_rows = _chip_default_block_rows()

    # Packed-sublane multiple of the I/O dtype: 8 for 32-bit, 16 for bf16/f16,
    # 32 for int8/fp8.
    itemsize = jnp.dtype(orig_dtype).itemsize
    sub_mult = max(8, 32 // max(1, itemsize))

    rows = pl.cdiv(n, _LANES)

    # Pick the block height.
    br = min(block_rows, rows)
    if br < rows:
        br = max(sub_mult, (br // sub_mult) * sub_mult)

    # v7x has 2 TensorCores per chip: keep the grid >= 2 and even so the
    # "parallel" axis shards evenly across both cores.
    if _is_dual_tensorcore() and rows >= 2 * sub_mult:
        n_blocks = pl.cdiv(rows, br)
        n_blocks = max(2, 2 * ((n_blocks + 1) // 2))  # round up to even
        br = min(br, _round_up(pl.cdiv(rows, n_blocks), sub_mult))

    compiler_params = pltpu.CompilerParams(dimension_semantics=("parallel",))

    if n == rows * _LANES:
        # 128-aligned: free reshape to a lane-dense (rows, 128) slab; one HBM
        # pass in, one out.  Pallas masks any partial final sublane block.
        x2d = flat.reshape(rows, _LANES)
        out2d = pl.pallas_call(
            _sigmoid_quant_kernel,
            out_shape=jax.ShapeDtypeStruct((rows, _LANES), orig_dtype),
            grid_spec=pltpu.PrefetchScalarGridSpec(
                num_scalar_prefetch=0,
                grid=(pl.cdiv(rows, br),),
                in_specs=[pl.BlockSpec((br, _LANES), lambda i: (i, 0))],
                out_specs=pl.BlockSpec((br, _LANES), lambda i: (i, 0)),
            ),
            compiler_params=compiler_params,
        )(x2d)
        return out2d.reshape(orig_shape)

    # Ragged element count: run directly over the flat 1-D array with a
    # lane-multiple block and let Pallas mask the partial final block.
    # Single HBM pass — no jnp.pad / tail-slice extra passes.
    bn = br * _LANES
    out_flat = pl.pallas_call(
        _sigmoid_quant_kernel,
        out_shape=jax.ShapeDtypeStruct((n,), orig_dtype),
        grid_spec=pltpu.PrefetchScalarGridSpec(
            num_scalar_prefetch=0,
            grid=(pl.cdiv(n, bn),),
            in_specs=[pl.BlockSpec((bn,), lambda i: (i,))],
            out_specs=pl.BlockSpec((bn,), lambda i: (i,)),
        ),
        compiler_params=compiler_params,
    )(flat)
    return out_flat.reshape(orig_shape)


def _reference(x):
    s = jax.nn.sigmoid(x.astype(jnp.float32))
    scale = 2.0 ** FL
    q = jnp.round(s * scale) / scale
    return q.astype(x.dtype)


if __name__ == "__main__":
    key = jax.random.PRNGKey(0)
    # NCHW-style input; the op is elementwise so any shape works.
    x = jax.random.normal(key, (2, 4, 16, 16), dtype=jnp.float32) * 3.0

    y = fixed_sigmoid(x)
    y = jax.block_until_ready(y)

    y_ref = _reference(x)
    assert y.shape == x.shape and y.dtype == x.dtype
    # Quantization-aware tolerance: allow at most one fixed-point LSB (2^-FL)
    # of difference (rounding near bin boundaries can flip by one step when
    # the sigmoid is computed via the tanh identity vs the exp form).
    lsb = 2.0 ** (-FL)
    max_err = float(jnp.max(jnp.abs(y.astype(jnp.float32) - y_ref.astype(jnp.float32))))
    assert max_err <= lsb + 1e-6, f"mismatch vs reference: {max_err}"

    print("KERNEL_OK")
</pallas_src>

<mosaic_0001>
module attributes {stable_mosaic.version = 11 : i64} {
  func.func @_sigmoid_quant_kernel(%arg0: i32, %arg1: memref<16x128xf32, #tpu.memory_space<vmem>>, %arg2: memref<16x128xf32, #tpu.memory_space<vmem>>) attributes {dimension_semantics = [#tpu.dimension_semantics<parallel>], iteration_bounds = array<i64: 1>, scalar_prefetch = 0 : i64, scratch_operands = 0 : i64, tpu.core_type = #tpu.core_type<tc>, window_params = [{transform_indices = @transform_0, window_bounds = array<i64: 16, 128>}, {transform_indices = @transform_1, window_bounds = array<i64: 16, 128>}]} {
    %c0 = arith.constant 0 : index
    %c0_0 = arith.constant 0 : index
    %0 = vector.load %arg1[%c0, %c0_0] : memref<16x128xf32, #tpu.memory_space<vmem>>, vector<16x128xf32>
    %cst = arith.constant 5.000000e-01 : f32
    %1 = vector.broadcast %cst : f32 to vector<16x128xf32>
    %2 = arith.mulf %1, %0 : vector<16x128xf32>
    %3 = math.tanh %2 : vector<16x128xf32>
    %cst_1 = arith.constant 1.280000e+02 : f32
    %4 = vector.broadcast %cst_1 : f32 to vector<16x128xf32>
    %5 = arith.mulf %3, %4 : vector<16x128xf32>
    %cst_2 = arith.constant 1.280000e+02 : f32
    %6 = vector.broadcast %cst_2 : f32 to vector<16x128xf32>
    %7 = arith.addf %5, %6 : vector<16x128xf32>
    %8 = math.roundeven %7 : vector<16x128xf32>
    %cst_3 = arith.constant 3.906250e-03 : f32
    %9 = vector.broadcast %cst_3 : f32 to vector<16x128xf32>
    %10 = arith.mulf %8, %9 : vector<16x128xf32>
    %c0_4 = arith.constant 0 : index
    %c0_5 = arith.constant 0 : index
    %11 = vector.load %arg2[%c0_4, %c0_5] : memref<16x128xf32, #tpu.memory_space<vmem>>, vector<16x128xf32>
    tpu.vector_store %arg2[%c0_4, %c0_5], %10 {strides = array<i32>} : memref<16x128xf32, #tpu.memory_space<vmem>>, vector<16x128xf32>,
    return
  }
  func.func @transform_0(%arg0: i32) -> (i32, i32) {
    %c0_i32 = arith.constant 0 : i32
    %c0_i32_0 = arith.constant 0 : i32
    return %arg0, %c0_i32 : i32, i32
  }
  func.func @transform_1(%arg0: i32) -> (i32, i32) {
    %c0_i32 = arith.constant 0 : i32
    %c0_i32_0 = arith.constant 0 : i32
    return %arg0, %c0_i32 : i32, i32
  }
}

</mosaic_0001>

<llo_original>
// kernel: fixed_sigmoid.1
$region0: #{fixed_sigmoid.1}
  #allocation0 [shape = 'u32[]', space=smem, size = 0x4, offset = 0x4, fixed_abs, tag = 'smem constant byte address 0x4 - core index']
  #allocation1 [shape = 'u32[72,128]{1,0:T(1,128)}', space=vmem, size = 0x9000, scoped, tag = 'internal scratch']
  %s0 = inlined_call_operand.vmem [shape: f32[16,128], index: 0, kind: input, shape index: {}]
  %s1 = inlined_call_operand.vmem [shape: f32[16,128], index: 1, kind: output, shape index: {}]
  %s2 = sld [smem:[#allocation0]]
  $region14: #{fixed_sigmoid.1} parent=0
    _
  %s4 = ssub.s32 1, %s2
  %s5 = scalar_select 0, %s4, %s2
  // Predicated region
  $region2: #{fixed_sigmoid.1} parent=0 // pred_check
    _
  $region3: #{fixed_sigmoid.1} parent=0 // pred_check_branch
    %7 = sbr.rel (0) target = $region5
  $region4: #{fixed_sigmoid.1} parent=0 // pred_region
    _
  $region5: #{fixed_sigmoid.1} parent=0 // pred_fallthru
    _
  %v8 = vld [vmem:[%s0] sm:$0xff]
  %v9 = vld [vmem:[%s0 + $0x8] sm:$0xff]
  %v10 = vmul.f32 %v8, 0.5
  %v11 = vmul.f32 %v9, 0.5
  %v12 = vtanh.pop %v10
  %v13 = vtanh.pop %v11
  %v14 = vmul.f32 %v12, 128.0
  %v15 = vmul.f32 %v13, 128.0
  %v16 = vadd.f32 %v14, 128.0
  %v17 = vadd.f32 %v15, 128.0
  %v18 = vround.ne.pseudo %v16
  %v19 = vround.ne.pseudo %v17
  %v20 = vmul.f32 %v18, 0.00390625
  %v21 = vmul.f32 %v19, 0.00390625
  %22 = vst [vmem:[%s1] sm:$0xff] %v20
  %23 = vst [vmem:[%s1 + $0x8] sm:$0xff] %v21
  // Predicated region
  $region6: #{fixed_sigmoid.1} parent=0 // pred_check
    _
  $region7: #{fixed_sigmoid.1} parent=0 // pred_check_branch
    %25 = sbr.rel (0) target = $region9
  $region8: #{fixed_sigmoid.1} parent=0 // pred_region
    _
  $region9: #{fixed_sigmoid.1} parent=0 // pred_fallthru
    _
  // Predicated region
  $region10: #{fixed_sigmoid.1} parent=0 // pred_check
    _
  $region11: #{fixed_sigmoid.1} parent=0 // pred_check_branch
    %27 = sbr.rel (0) target = $region13
  $region12: #{fixed_sigmoid.1} parent=0 // pred_region
    _
  $region13: #{fixed_sigmoid.1} parent=0 // pred_fallthru
    _

</llo_original>
